<compile_context>
chip_gen: v5e
topology: v5e:2x2
jax: 0.10.0
libtpu: 0.0.40
codegen_flags: <defaults>
</compile_context>

<pallas_src>
import functools

import jax
import jax.numpy as jnp
from jax import lax
from jax.experimental import pallas as pl
from jax.experimental.pallas import tpu as pltpu

INPUT_SIZE = 13
HIDDEN1 = 64
HIDDEN2 = 32
OUTPUT_SIZE = 1
BIAS_TOTAL = HIDDEN1 + HIDDEN2 + OUTPUT_SIZE  # 97
_LANE = 128


def _round_up(a, b):
    return ((a + b - 1) // b) * b


def _mlp_kernel(x_ref, w1_ref, w2_ref, w3_ref, b_ref, o_ref, *, chunk):
    """One grid step: (13, TILE_M) bf16 x-tile -> (1, TILE_M) f32 predictions.

    The tile is processed in `chunk`-column sub-chunks so the f32 h1/h2
    intermediates only ever materialize for one sub-chunk (~1 MiB), keeping
    VMEM use bounded no matter how large TILE_M is.
    """
    tile_m = x_ref.shape[1]            # static
    n_chunks = tile_m // chunk         # static; wrapper guarantees exact division

    # Loop-invariant loads (weights stay VMEM-resident across all grid steps).
    w1 = w1_ref[...]                                  # (64, 13) bf16
    w2 = w2_ref[...]                                  # (32, 64) bf16
    w3 = w3_ref[...]                                  # (32, 1)  f32 column vector
    b1 = b_ref[0:HIDDEN1, :]                          # (64, 1)  f32
    b2 = b_ref[HIDDEN1:HIDDEN1 + HIDDEN2, :]          # (32, 1)  f32
    b3 = b_ref[HIDDEN1 + HIDDEN2:BIAS_TOTAL, :]       # (1, 1)   f32

    def body(c, carry):
        start = pl.multiple_of(c * chunk, _LANE)
        x = x_ref[:, pl.ds(start, chunk)]             # (13, chunk) bf16

        # Layer 1 (MXU): (64, 13) @ (13, chunk) -> f32; bias + ReLU on the VPU.
        h1 = jnp.dot(w1, x, preferred_element_type=jnp.float32)
        h1 = jnp.maximum(h1 + b1, 0.0)

        # Layer 2 (MXU): (32, 64) @ (64, chunk) -> f32; bias + ReLU on the VPU.
        h2 = jnp.dot(w2, h1.astype(jnp.bfloat16),
                     preferred_element_type=jnp.float32)
        h2 = jnp.maximum(h2 + b2, 0.0)

        # Layer 3 off the MXU: broadcast-multiply (VPU) + sublane reduce (XLU),
        # all in f32. Lane-dense (1, chunk) store.
        out = jnp.sum(w3 * h2, axis=0, keepdims=True) + b3
        o_ref[:, pl.ds(start, chunk)] = out.astype(o_ref.dtype)
        return carry

    lax.fori_loop(0, n_chunks, body, 0)


@functools.partial(jax.jit, static_argnames=("tile_m", "chunk"))
def linear_regression_forward(x, params, *, tile_m=32768, chunk=1024):
    """x: (N, 13) float32.  params in PyTorch (out, in) orientation:
       w1 (64,13), b1 (64,), w2 (32,64), b2 (32,), w3 (1,32), b3 (1,).
       Returns (N, 1) float32."""
    n = x.shape[0]

    # --- static tile sizing (shapes are static under jit) --------------------
    chunk = min(max(_round_up(chunk, _LANE), _LANE), _round_up(n, _LANE))
    tile_m = max(chunk, min(_round_up(tile_m, chunk), _round_up(n, chunk)))
    # Prefer >= 2 grid blocks (balanced) when possible so v7x's second
    # TensorCore gets work via dimension_semantics=("parallel",).
    tile_m = min(tile_m, _round_up(-(-n // 2), chunk))
    n_blocks = pl.cdiv(n, tile_m)
    n_pad = n_blocks * tile_m

    # Batch on the lane axis; bf16 MXU operands, f32 accumulation in-kernel.
    # Padded columns compute ReLU(bias) garbage; harmless because they are
    # sliced off below and there is no cross-column reduction.
    # TODO(synk): for repeated calls at large N, keep/cache x upstream in
    # (13, N) bf16 layout so this transpose/cast/pad pass is not redone per call.
    x_t = x.T.astype(jnp.bfloat16)                    # (13, N)
    if n_pad != n:
        x_t = jnp.pad(x_t, ((0, 0), (0, n_pad - n)))

    w1 = params["w1"].astype(jnp.bfloat16)            # (64, 13)
    w2 = params["w2"].astype(jnp.bfloat16)            # (32, 64)
    w3_col = params["w3"].reshape(HIDDEN2, OUTPUT_SIZE).astype(jnp.float32)  # (32, 1)
    b_packed = jnp.concatenate(
        [params["b1"], params["b2"], params["b3"]]
    ).reshape(BIAS_TOTAL, 1).astype(jnp.float32)      # (97, 1)

    flops = 2 * n_pad * (INPUT_SIZE * HIDDEN1 + HIDDEN1 * HIDDEN2
                         + HIDDEN2 * OUTPUT_SIZE)
    bytes_accessed = (INPUT_SIZE * n_pad * 2          # x tiles streamed (bf16)
                      + n_pad * OUTPUT_SIZE * 4       # f32 output
                      + (w1.size + w2.size) * 2 + w3_col.size * 4
                      + BIAS_TOTAL * 4)
    cost = pl.CostEstimate(flops=flops, transcendentals=0,
                           bytes_accessed=bytes_accessed)

    resident = lambda shape: pl.BlockSpec(shape, lambda i: (0, 0))  # VMEM-resident

    out_t = pl.pallas_call(
        functools.partial(_mlp_kernel, chunk=chunk),
        out_shape=jax.ShapeDtypeStruct((OUTPUT_SIZE, n_pad), jnp.float32),
        grid_spec=pltpu.PrefetchScalarGridSpec(
            num_scalar_prefetch=0,
            grid=(n_blocks,),
            in_specs=[
                pl.BlockSpec((INPUT_SIZE, tile_m), lambda i: (0, i)),  # x (streamed)
                resident((HIDDEN1, INPUT_SIZE)),                       # w1
                resident((HIDDEN2, HIDDEN1)),                          # w2
                resident((HIDDEN2, OUTPUT_SIZE)),                      # w3 column
                resident((BIAS_TOTAL, 1)),                             # packed biases
            ],
            out_specs=pl.BlockSpec((OUTPUT_SIZE, tile_m), lambda i: (0, i)),
        ),
        compiler_params=pltpu.CompilerParams(
            dimension_semantics=("parallel",),
        ),
        cost_estimate=cost,
    )(x_t, w1, w2, w3_col, b_packed)

    return out_t[:, :n].T                             # (N, 1)


def init_params(key):
    """nn.Linear-style init (uniform +/-1/sqrt(fan_in)), PyTorch (out, in) orientation."""
    ks = jax.random.split(key, 6)

    def lin(kw, kb, fan_in, fan_out):
        bound = 1.0 / (float(fan_in) ** 0.5)
        w = jax.random.uniform(kw, (fan_out, fan_in), jnp.float32, -bound, bound)
        b = jax.random.uniform(kb, (fan_out,), jnp.float32, -bound, bound)
        return w, b

    w1, b1 = lin(ks[0], ks[1], INPUT_SIZE, HIDDEN1)
    w2, b2 = lin(ks[2], ks[3], HIDDEN1, HIDDEN2)
    w3, b3 = lin(ks[4], ks[5], HIDDEN2, OUTPUT_SIZE)
    return {"w1": w1, "b1": b1, "w2": w2, "b2": b2, "w3": w3, "b3": b3}


def ref_forward(x, params):
    """Plain-JAX reference with the same bf16-operand / f32-accumulation recipe."""
    w1 = params["w1"].astype(jnp.bfloat16)
    w2 = params["w2"].astype(jnp.bfloat16)
    h1 = jnp.dot(x.astype(jnp.bfloat16), w1.T,
                 preferred_element_type=jnp.float32) + params["b1"]
    h1 = jnp.maximum(h1, 0.0)
    h2 = jnp.dot(h1.astype(jnp.bfloat16), w2.T,
                 preferred_element_type=jnp.float32) + params["b2"]
    h2 = jnp.maximum(h2, 0.0)
    out = jnp.dot(h2, params["w3"].T) + params["b3"]   # layer 3 in f32 (matches kernel)
    return out


if __name__ == "__main__":
    key = jax.random.PRNGKey(0)
    k_params, k_x1, k_x2 = jax.random.split(key, 3)
    params = init_params(k_params)

    # Small primary test (batch=8): single block, single chunk.
    x_small = jax.random.normal(k_x1, (8, INPUT_SIZE), jnp.float32)
    out_small = jax.block_until_ready(linear_regression_forward(x_small, params))
    ref_small = ref_forward(x_small, params)
    assert out_small.shape == (8, OUTPUT_SIZE)
    assert jnp.allclose(out_small, ref_small, atol=2e-2, rtol=2e-2)

    # Secondary test (batch=2500): exercises multi-block grid, multi-chunk inner
    # loop and ragged-tail padding.
    x_big = jax.random.normal(k_x2, (2500, INPUT_SIZE), jnp.float32)
    out_big = jax.block_until_ready(linear_regression_forward(x_big, params))
    ref_big = ref_forward(x_big, params)
    assert out_big.shape == (2500, OUTPUT_SIZE)
    assert jnp.allclose(out_big, ref_big, atol=2e-2, rtol=2e-2)

    print("KERNEL_OK")
</pallas_src>

<mosaic_0001>
module attributes {stable_mosaic.version = 11 : i64} {
  func.func @_mlp_kernel(%arg0: i32, %arg1: memref<13x128xbf16, #tpu.memory_space<vmem>>, %arg2: memref<64x13xbf16, #tpu.memory_space<vmem>>, %arg3: memref<32x64xbf16, #tpu.memory_space<vmem>>, %arg4: memref<32x1xf32, #tpu.memory_space<vmem>>, %arg5: memref<97x1xf32, #tpu.memory_space<vmem>>, %arg6: memref<1x128xf32, #tpu.memory_space<vmem>>) attributes {dimension_semantics = [#tpu.dimension_semantics<parallel>], iteration_bounds = array<i64: 1>, scalar_prefetch = 0 : i64, scratch_operands = 0 : i64, tpu.core_type = #tpu.core_type<tc>, window_params = [{transform_indices = @transform_0, window_bounds = array<i64: 13, 128>}, {pipeline_mode = #tpu.pipeline_mode<synchronous>, transform_indices = @transform_1, window_bounds = array<i64: 64, 13>}, {pipeline_mode = #tpu.pipeline_mode<synchronous>, transform_indices = @transform_2, window_bounds = array<i64: 32, 64>}, {pipeline_mode = #tpu.pipeline_mode<synchronous>, transform_indices = @transform_3, window_bounds = array<i64: 32, 1>}, {pipeline_mode = #tpu.pipeline_mode<synchronous>, transform_indices = @transform_4, window_bounds = array<i64: 97, 1>}, {transform_indices = @transform_5, window_bounds = array<i64: 1, 128>}]} {
    %c0 = arith.constant 0 : index
    %c0_0 = arith.constant 0 : index
    %0 = vector.load %arg2[%c0, %c0_0] : memref<64x13xbf16, #tpu.memory_space<vmem>>, vector<64x13xbf16>
    %c0_1 = arith.constant 0 : index
    %c0_2 = arith.constant 0 : index
    %1 = vector.load %arg3[%c0_1, %c0_2] : memref<32x64xbf16, #tpu.memory_space<vmem>>, vector<32x64xbf16>
    %c0_3 = arith.constant 0 : index
    %c0_4 = arith.constant 0 : index
    %2 = vector.load %arg4[%c0_3, %c0_4] : memref<32x1xf32, #tpu.memory_space<vmem>>, vector<32x1xf32>
    %c0_5 = arith.constant 0 : index
    %c0_6 = arith.constant 0 : index
    %3 = vector.load %arg5[%c0_5, %c0_6] : memref<97x1xf32, #tpu.memory_space<vmem>>, vector<64x1xf32>
    %c64 = arith.constant 64 : index
    %c0_7 = arith.constant 0 : index
    %4 = vector.load %arg5[%c64, %c0_7] : memref<97x1xf32, #tpu.memory_space<vmem>>, vector<32x1xf32>
    %c96 = arith.constant 96 : index
    %c0_8 = arith.constant 0 : index
    %5 = vector.load %arg5[%c96, %c0_8] : memref<97x1xf32, #tpu.memory_space<vmem>>, vector<1x1xf32>
    %c0_i32 = arith.constant 0 : i32
    %c128_i32 = arith.constant 128 : i32
    %6 = arith.muli %c0_i32, %c128_i32 : i32
    %7 = tpu.assume_multiple %6, 128 : i32
    %c0_9 = arith.constant 0 : index
    %8 = arith.index_cast %7 : i32 to index
    %9 = vector.load %arg1[%c0_9, %8] : memref<13x128xbf16, #tpu.memory_space<vmem>>, vector<13x128xbf16>
    %cst = arith.constant dense<0.000000e+00> : vector<64x128xf32>
    %10 = tpu.matmul %0, %9, %cst {dimension_numbers = #tpu.dot_dimension_numbers<[1], [0], [0], [1], [0, 0, 1, 1], [], []>} : vector<64x13xbf16>, vector<13x128xbf16>, vector<64x128xf32> -> vector<64x128xf32>
    %11 = vector.broadcast %3 : vector<64x1xf32> to vector<64x128xf32>
    %12 = arith.addf %10, %11 : vector<64x128xf32>
    %cst_10 = arith.constant 0.000000e+00 : f32
    %13 = vector.broadcast %cst_10 : f32 to vector<64x128xf32>
    %14 = arith.maximumf %12, %13 : vector<64x128xf32>
    %15 = arith.truncf %14 : vector<64x128xf32> to vector<64x128xbf16>
    %cst_11 = arith.constant dense<0.000000e+00> : vector<32x128xf32>
    %16 = tpu.matmul %1, %15, %cst_11 {dimension_numbers = #tpu.dot_dimension_numbers<[1], [0], [0], [1], [0, 0, 1, 1], [], []>} : vector<32x64xbf16>, vector<64x128xbf16>, vector<32x128xf32> -> vector<32x128xf32>
    %17 = vector.broadcast %4 : vector<32x1xf32> to vector<32x128xf32>
    %18 = arith.addf %16, %17 : vector<32x128xf32>
    %cst_12 = arith.constant 0.000000e+00 : f32
    %19 = vector.broadcast %cst_12 : f32 to vector<32x128xf32>
    %20 = arith.maximumf %18, %19 : vector<32x128xf32>
    %21 = vector.broadcast %2 : vector<32x1xf32> to vector<32x128xf32>
    %22 = arith.mulf %21, %20 : vector<32x128xf32>
    %cst_13 = arith.constant dense<0.000000e+00> : vector<128xf32>
    %23 = vector.multi_reduction <add>, %22, %cst_13 [0] : vector<32x128xf32> to vector<128xf32>
    %24 = vector.shape_cast %23 : vector<128xf32> to vector<1x128xf32>
    %25 = vector.broadcast %5 : vector<1x1xf32> to vector<1x128xf32>
    %26 = arith.addf %24, %25 : vector<1x128xf32>
    %c0_14 = arith.constant 0 : index
    %27 = arith.index_cast %7 : i32 to index
    %28 = vector.load %arg6[%c0_14, %27] : memref<1x128xf32, #tpu.memory_space<vmem>>, vector<1x128xf32>
    tpu.vector_store %arg6[%c0_14, %27], %26 {strides = array<i32>} : memref<1x128xf32, #tpu.memory_space<vmem>>, vector<1x128xf32>,
    %c1_i32 = arith.constant 1 : i32
    return
  }
  func.func @transform_0(%arg0: i32) -> (i32, i32) {
    %c0_i32 = arith.constant 0 : i32
    %c0_i32_0 = arith.constant 0 : i32
    return %c0_i32, %arg0 : i32, i32
  }
  func.func @transform_1(%arg0: i32) -> (i32, i32) {
    %c0_i32 = arith.constant 0 : i32
    %c0_i32_0 = arith.constant 0 : i32
    %c0_i32_1 = arith.constant 0 : i32
    return %c0_i32, %c0_i32_0 : i32, i32
  }
  func.func @transform_2(%arg0: i32) -> (i32, i32) {
    %c0_i32 = arith.constant 0 : i32
    %c0_i32_0 = arith.constant 0 : i32
    %c0_i32_1 = arith.constant 0 : i32
    return %c0_i32, %c0_i32_0 : i32, i32
  }
  func.func @transform_3(%arg0: i32) -> (i32, i32) {
    %c0_i32 = arith.constant 0 : i32
    %c0_i32_0 = arith.constant 0 : i32
    %c0_i32_1 = arith.constant 0 : i32
    return %c0_i32, %c0_i32_0 : i32, i32
  }
  func.func @transform_4(%arg0: i32) -> (i32, i32) {
    %c0_i32 = arith.constant 0 : i32
    %c0_i32_0 = arith.constant 0 : i32
    %c0_i32_1 = arith.constant 0 : i32
    return %c0_i32, %c0_i32_0 : i32, i32
  }
  func.func @transform_5(%arg0: i32) -> (i32, i32) {
    %c0_i32 = arith.constant 0 : i32
    %c0_i32_0 = arith.constant 0 : i32
    return %c0_i32, %arg0 : i32, i32
  }
}

</mosaic_0001>

<llo_original>
// kernel: linear_regression_forward.1
$region0: #{linear_regression_forward.1}
  #allocation0 [shape = 'u32[]', space=smem, size = 0x4, offset = 0x4, fixed_abs, tag = 'smem constant byte address 0x4 - core index']
  #allocation1 [shape = 'u32[72,128]{1,0:T(1,128)}', space=vmem, size = 0x9000, scoped, tag = 'internal scratch']
  %s0 = inlined_call_operand.vmem [shape: bf16[13,128], index: 0, kind: input, shape index: {}]
  %s1 = inlined_call_operand.vmem [shape: bf16[64,13], index: 1, kind: input, shape index: {}]
  %s2 = inlined_call_operand.vmem [shape: bf16[32,64], index: 2, kind: input, shape index: {}]
  %s3 = inlined_call_operand.vmem [shape: f32[32,1], index: 3, kind: input, shape index: {}]
  %s4 = inlined_call_operand.vmem [shape: f32[97,1], index: 4, kind: input, shape index: {}]
  %s5 = inlined_call_operand.vmem [shape: f32[1,128], index: 5, kind: output, shape index: {}]
  %s6 = sld [smem:[#allocation0]]
  $region30: #{linear_regression_forward.1} parent=0
    _
  %s8 = ssub.s32 1, %s6
  %s9 = scalar_select 0, %s8, %s6
  // Predicated region
  $region2: #{linear_regression_forward.1} parent=0 // pred_check
    _
  $region3: #{linear_regression_forward.1} parent=0 // pred_check_branch
    %11 = sbr.rel (0) target = $region5
  $region4: #{linear_regression_forward.1} parent=0 // pred_region
    _
  $region5: #{linear_regression_forward.1} parent=0 // pred_fallthru
    _
  // Predicated region
  $region6: #{linear_regression_forward.1} parent=0 // pred_check
    _
  $region7: #{linear_regression_forward.1} parent=0 // pred_check_branch
    %13 = sbr.rel (0) target = $region9
  $region8: #{linear_regression_forward.1} parent=0 // pred_region
    _
  $region9: #{linear_regression_forward.1} parent=0 // pred_fallthru
    _
  // Predicated region
  $region10: #{linear_regression_forward.1} parent=0 // pred_check
    _
  $region11: #{linear_regression_forward.1} parent=0 // pred_check_branch
    %15 = sbr.rel (0) target = $region13
  $region12: #{linear_regression_forward.1} parent=0 // pred_region
    _
  $region13: #{linear_regression_forward.1} parent=0 // pred_fallthru
    _
  // Predicated region
  $region14: #{linear_regression_forward.1} parent=0 // pred_check
    _
  $region15: #{linear_regression_forward.1} parent=0 // pred_check_branch
    %17 = sbr.rel (0) target = $region17
  $region16: #{linear_regression_forward.1} parent=0 // pred_region
    _
  $region17: #{linear_regression_forward.1} parent=0 // pred_fallthru
    _
  // Predicated region
  $region18: #{linear_regression_forward.1} parent=0 // pred_check
    _
  $region19: #{linear_regression_forward.1} parent=0 // pred_check_branch
    %19 = sbr.rel (0) target = $region21
  $region20: #{linear_regression_forward.1} parent=0 // pred_region
    _
  $region21: #{linear_regression_forward.1} parent=0 // pred_fallthru
    _
  %v21 = vld [vmem:[%s1] sm:$0xf]
  %v22 = vld [vmem:[%s1 + $0x4] sm:$0xf]
  %v23 = vld [vmem:[%s1 + $0x8] sm:$0xf]
  %v24 = vld [vmem:[%s1 + $0xc] sm:$0xf]
  %v25 = vld [vmem:[%s1 + $0x10] sm:$0xf]
  %v26 = vld [vmem:[%s1 + $0x14] sm:$0xf]
  %v27 = vld [vmem:[%s1 + $0x18] sm:$0xf]
  %v28 = vld [vmem:[%s1 + $0x1c] sm:$0xf]
  %v29 = vld [vmem:[%s2] sm:$0xf]
  %v30 = vld [vmem:[%s2 + $0x4] sm:$0xf]
  %v31 = vld [vmem:[%s2 + $0x8] sm:$0xf]
  %v32 = vld [vmem:[%s2 + $0xc] sm:$0xf]
  %v33 = vld [vmem:[%s3] sm:$0xff]
  %v34 = vld [vmem:[%s3 + $0x8] sm:$0xff]
  %v35 = vld [vmem:[%s3 + $0x10] sm:$0xff]
  %v36 = vld [vmem:[%s3 + $0x18] sm:$0xff]
  %v37 = vld [vmem:[%s4] sm:$0xff]
  %v38 = vld [vmem:[%s4 + $0x8] sm:$0xff]
  %v39 = vld [vmem:[%s4 + $0x10] sm:$0xff]
  %v40 = vld [vmem:[%s4 + $0x18] sm:$0xff]
  %v41 = vld [vmem:[%s4 + $0x20] sm:$0xff]
  %v42 = vld [vmem:[%s4 + $0x28] sm:$0xff]
  %v43 = vld [vmem:[%s4 + $0x30] sm:$0xff]
  %v44 = vld [vmem:[%s4 + $0x38] sm:$0xff]
  %v45 = vld [vmem:[%s4 + $0x40] sm:$0xff]
  %v46 = vld [vmem:[%s4 + $0x48] sm:$0xff]
  %v47 = vld [vmem:[%s4 + $0x50] sm:$0xff]
  %v48 = vld [vmem:[%s4 + $0x58] sm:$0xff]
  %v49 = vld [vmem:[%s4 + $0x60] sm:$0x1]
  %v50 = vld [vmem:[%s0] sm:$0xf]
  %v51 = vld [vmem:[%s0 + $0x4] sm:$0x7]
  %53 = vset.pattern.permute.xlu0 0
  %54 = vperm.xlu0 %53, %v37
  %v55 = vpop.permute.xlu0 %54
  %58 = vset.pattern.permute.xlu0 0
  %59 = vperm.xlu0 %58, %v38
  %v60 = vpop.permute.xlu0 %59
  %63 = vset.pattern.permute.xlu0 0
  %64 = vperm.xlu0 %63, %v39
  %v65 = vpop.permute.xlu0 %64
  %68 = vset.pattern.permute.xlu0 0
  %69 = vperm.xlu0 %68, %v40
  %v70 = vpop.permute.xlu0 %69
  %73 = vset.pattern.permute.xlu0 0
  %74 = vperm.xlu0 %73, %v41
  %v75 = vpop.permute.xlu0 %74
  %78 = vset.pattern.permute.xlu0 0
  %79 = vperm.xlu0 %78, %v42
  %v80 = vpop.permute.xlu0 %79
  %83 = vset.pattern.permute.xlu0 0
  %84 = vperm.xlu0 %83, %v43
  %v85 = vpop.permute.xlu0 %84
  %88 = vset.pattern.permute.xlu0 0
  %89 = vperm.xlu0 %88, %v44
  %v90 = vpop.permute.xlu0 %89
  %v100 = vunpack.c.l.b16 %v21
  %v101 = vunpack.c.l.b16 %v22
  %v102 = vunpack.c.l.b16 %v23
  %v103 = vunpack.c.l.b16 %v24
  %v104 = vunpack.c.l.b16 %v25
  %v105 = vunpack.c.l.b16 %v26
  %v106 = vunpack.c.l.b16 %v27
  %v107 = vunpack.c.l.b16 %v28
  %v108 = vpack.c.b16 %v101, %v100
  %v109 = vpack.c.b16 %v103, %v102
  %v110 = vpack.c.b16 %v105, %v104
  %v111 = vpack.c.b16 %v107, %v106
  %v114 = vunpack.c.l.b16 %v50
  %v115 = vunpack.c.l.b16 %v51
  %v116 = vpack.c.b16 %v115, %v114
  %vm117 = vcmask 105472
  %v119 = vsel %vm117, %v108, 0
  %v122 = vsel %vm117, %v109, 0
  %v125 = vsel %vm117, %v110, 0
  %v128 = vsel %vm117, %v111, 0
  %vm130 = vcmask 1045504
  %vm131 = vcmask 1046528
  %v132 = vsel %vm130, 4294967295, 65535
  %v133 = vsel %vm131, %v132, 0
  %v135 = vand.u32 %v116, %v133
  %137 = vmatpush.bf16.msra.mxu0 0
  %138 = vmatpush.bf16.msra.mxu0 0
  %139 = vmatpush.bf16.msra.mxu0 0
  %140 = vmatpush.bf16.msra.mxu0 0
  %141 = vmatpush.bf16.msra.mxu0 0
  %142 = vmatpush.bf16.msra.mxu0 0
  %143 = vmatpush.bf16.msra.mxu0 0
  %144 = vmatpush.bf16.msra.mxu0 %v135
  %145 = vmatmul.bf16.gmra.mxu0 %v119
  %v146 = vpop.f32.mrf.mxu0
  %v147 = vadd.f32 %v55, %v146
  %v148 = vpop.f32.mrf.mxu0
  %v149 = vadd.f32 %v60, %v148
  %150 = vmatmul.bf16.gmra.mxu0 %v122
  %v151 = vpop.f32.mrf.mxu0
  %v152 = vadd.f32 %v65, %v151
  %v153 = vpop.f32.mrf.mxu0
  %v154 = vadd.f32 %v70, %v153
  %155 = vmatmul.bf16.gmra.mxu0 %v125
  %v156 = vpop.f32.mrf.mxu0
  %v157 = vadd.f32 %v75, %v156
  %v158 = vpop.f32.mrf.mxu0
  %v159 = vadd.f32 %v80, %v158
  %160 = vmatmul.bf16.gmra.mxu0 %v128
  %v161 = vpop.f32.mrf.mxu0
  %v162 = vadd.f32 %v85, %v161
  %v163 = vpop.f32.mrf.mxu0
  %v164 = vadd.f32 %v90, %v163
  %165 = vdwg.mxu0
  %v166 = vmax.f32 %v147, 0.0
  %v167 = vmax.f32 %v149, 0.0
  %v168 = vmax.f32 %v152, 0.0
  %v169 = vmax.f32 %v154, 0.0
  %v170 = vmax.f32 %v157, 0.0
  %v171 = vmax.f32 %v159, 0.0
  %v172 = vmax.f32 %v162, 0.0
  %v173 = vmax.f32 %v164, 0.0
  %v174 = vpack.c.bf16 %v167, %v166
  %v175 = vpack.c.bf16 %v169, %v168
  %v176 = vpack.c.bf16 %v171, %v170
  %v177 = vpack.c.bf16 %v173, %v172
  %179 = vset.pattern.permute.xlu0 0
  %180 = vperm.xlu0 %179, %v45
  %v181 = vpop.permute.xlu0 %180
  %184 = vset.pattern.permute.xlu0 0
  %185 = vperm.xlu0 %184, %v46
  %v186 = vpop.permute.xlu0 %185
  %189 = vset.pattern.permute.xlu0 0
  %190 = vperm.xlu0 %189, %v47
  %v191 = vpop.permute.xlu0 %190
  %194 = vset.pattern.permute.xlu0 0
  %195 = vperm.xlu0 %194, %v48
  %v196 = vpop.permute.xlu0 %195
  %v202 = vunpack.c.l.b16 %v29
  %v203 = vunpack.c.l.b16 %v30
  %v204 = vunpack.c.l.b16 %v31
  %v205 = vunpack.c.l.b16 %v32
  %v206 = vpack.c.b16 %v203, %v202
  %v207 = vpack.c.b16 %v205, %v204
  %vm208 = vcmask 523264
  %v210 = vsel %vm208, %v206, 0
  %v213 = vsel %vm208, %v207, 0
  %215 = vmatpush.bf16.msra.mxu0 0
  %216 = vmatpush.bf16.msra.mxu0 0
  %217 = vmatpush.bf16.msra.mxu0 0
  %218 = vmatpush.bf16.msra.mxu0 0
  %219 = vmatpush.bf16.msra.mxu0 %v177
  %220 = vmatpush.bf16.msra.mxu0 %v176
  %221 = vmatpush.bf16.msra.mxu0 %v175
  %222 = vmatpush.bf16.msra.mxu0 %v174
  %223 = vmatmul.bf16.gmra.mxu0 %v210
  %v224 = vpop.f32.mrf.mxu0
  %v225 = vadd.f32 %v181, %v224
  %v226 = vpop.f32.mrf.mxu0
  %v227 = vadd.f32 %v186, %v226
  %228 = vmatmul.bf16.gmra.mxu0 %v213
  %v229 = vpop.f32.mrf.mxu0
  %v230 = vadd.f32 %v191, %v229
  %v231 = vpop.f32.mrf.mxu0
  %v232 = vadd.f32 %v196, %v231
  %233 = vdwg.mxu0
  %v234 = vmax.f32 %v225, 0.0
  %v235 = vmax.f32 %v227, 0.0
  %v236 = vmax.f32 %v230, 0.0
  %v237 = vmax.f32 %v232, 0.0
  %239 = vset.pattern.permute.xlu0 0
  %240 = vperm.xlu0 %239, %v33
  %v241 = vpop.permute.xlu0 %240
  %244 = vset.pattern.permute.xlu0 0
  %245 = vperm.xlu0 %244, %v34
  %v246 = vpop.permute.xlu0 %245
  %249 = vset.pattern.permute.xlu0 0
  %250 = vperm.xlu0 %249, %v35
  %v251 = vpop.permute.xlu0 %250
  %254 = vset.pattern.permute.xlu0 0
  %255 = vperm.xlu0 %254, %v36
  %v256 = vpop.permute.xlu0 %255
  %v258 = vmul.f32 %v241, %v234
  %v259 = vmul.f32 %v246, %v235
  %v260 = vmul.f32 %v251, %v236
  %v261 = vmul.f32 %v256, %v237
  %v262 = vadd.f32 %v258, %v259
  %v263 = vadd.f32 %v262, %v260
  %v264 = vadd.f32 %v263, %v261
  %v265 = vrot.slane %v264, 4
  %v266 = vadd.f32 %v264, %v265
  %v267 = vrot.slane %v266, 2
  %v268 = vadd.f32 %v266, %v267
  %v269 = vrot.slane %v268, 1
  %v270 = vadd.f32 %v268, %v269
  %272 = vset.pattern.permute.xlu0 0
  %273 = vperm.xlu0 %272, %v49
  %v274 = vpop.permute.xlu0 %273
  %v276 = vadd.f32 %v270, %v274
  %277 = vst [vmem:[%s5] sm:$0x1] %v276
  // Predicated region
  $region22: #{linear_regression_forward.1} parent=0 // pred_check
    _
  $region23: #{linear_regression_forward.1} parent=0 // pred_check_branch
    %279 = sbr.rel (0) target = $region25
  $region24: #{linear_regression_forward.1} parent=0 // pred_region
    _
  $region25: #{linear_regression_forward.1} parent=0 // pred_fallthru
    _
  // Predicated region
  $region26: #{linear_regression_forward.1} parent=0 // pred_check
    _
  $region27: #{linear_regression_forward.1} parent=0 // pred_check_branch
    %281 = sbr.rel (0) target = $region29
  $region28: #{linear_regression_forward.1} parent=0 // pred_region
    _
  $region29: #{linear_regression_forward.1} parent=0 // pred_fallthru
    _

</llo_original>
